<compile_context>
chip_gen: v7x
topology: tpu7x:2x2x1
jax: 0.10.0
libtpu: 0.0.40
codegen_flags: <defaults>
</compile_context>

<pallas_src>
import functools

import jax
import jax.numpy as jnp
from jax.experimental import pallas as pl
from jax.experimental.pallas import tpu as pltpu

_C = 16  # padded channel width shared by every layer
_LAYERS = [  # (Cin, Cout, activation) of the original torch layers
    (1, 16, "relu"),
    (16, 16, "relu"),
    (16, 16, "relu"),
    (16, 3, "tanh"),
]


# ----------------------------------------------------------------------------
# pltpu.roll convention probe (expected to match jnp.roll; checked once).
# ----------------------------------------------------------------------------
def _roll_probe_kernel(x_ref, o_ref):
    o_ref[...] = pltpu.roll(x_ref[...], shift=1, axis=1)


_ROLL_LIKE_JNP = None


def _get_roll_like_jnp():
    """True iff pltpu.roll(x, s)[p] == x[p - s] (i.e. jnp.roll convention)."""
    global _ROLL_LIKE_JNP
    if _ROLL_LIKE_JNP is None:
        with jax.ensure_compile_time_eval():
            x = jnp.broadcast_to(jnp.arange(256, dtype=jnp.float32)[None, :],
                                 (8, 256))
            got = pl.pallas_call(
                _roll_probe_kernel,
                out_shape=jax.ShapeDtypeStruct((8, 256), jnp.float32),
            )(x)
            _ROLL_LIKE_JNP = bool(jnp.array_equal(got, jnp.roll(x, 1, axis=1)))
    return _ROLL_LIKE_JNP


# ----------------------------------------------------------------------------
# Fused 4-layer conv net, one image per grid step.
# ----------------------------------------------------------------------------
def _fused_net_kernel(x_ref, w_ref, b_ref, o_ref, stk_ref, *, H, W,
                      roll_like_jnp):
    """x_ref : (C, H*W)      input image, channels zero-padded to C
    w_ref : (4, C, 9*C)      per-layer im2col weights  W[o, tap*C + i]
    b_ref : (4, C, H*W)      per-layer biases, pre-broadcast over lanes
    o_ref : (C, H*W)         final activation (flattened NCHW slab)
    stk_ref : (9*C, H*W)     VMEM im2col stack (shared across layers)
    """
    C = _C
    HW = H * W

    # Boundary-validity masks for 'same' padding, built once per grid step.
    col = jax.lax.broadcasted_iota(jnp.int32, (C, HW), 1)
    xi = col % W
    yi = col // W
    x_has_left = xi >= 1           # source column x-1 exists
    x_has_right = xi <= W - 2      # source column x+1 exists
    y_has_up = yi >= 1             # source row y-1 exists
    y_has_down = yi <= H - 2       # source row y+1 exists

    act = x_ref[...]               # (C, HW), stays a register value throughout

    for layer in range(4):
        # Build the im2col stack: row block `tap` holds the activation shifted
        # by (dy, dx) with out-of-image positions zeroed.  Shifts are XLU lane
        # rotations; stores are sublane-aligned (offsets are multiples of 16).
        for tap in range(9):
            dy, dx = tap // 3 - 1, tap % 3 - 1
            off = dy * W + dx      # source flat offset
            if off == 0:
                s = act
            else:
                amt = (-off) % HW if roll_like_jnp else off % HW
                s = pltpu.roll(act, shift=amt, axis=1)
            mask = None
            if dx == -1:
                mask = x_has_left
            elif dx == 1:
                mask = x_has_right
            if dy == -1:
                mask = y_has_up if mask is None else jnp.logical_and(mask, y_has_up)
            elif dy == 1:
                mask = y_has_down if mask is None else jnp.logical_and(mask, y_has_down)
            if mask is not None:
                s = jnp.where(mask, s, 0.0)
            stk_ref[tap * C:(tap + 1) * C, :] = s

        # One MXU dot per layer: (C, 9C) x (9C, HW) -> (C, HW), lane-dense.
        z = jnp.dot(w_ref[layer], stk_ref[...],
                    preferred_element_type=jnp.float32) + b_ref[layer]
        if layer < 3:
            act = jnp.maximum(z, 0.0)          # ReLU
        else:
            o_ref[...] = jnp.tanh(z)           # Tanh, already flat NCHW


def _pack_params(params, HW):
    """Pack the four (HWIO weight, bias) pairs into zero-padded uniform
    tensors: weights -> (4, C, 9*C) with W[o, tap*C+i] = w[kh,kw,i,o];
    biases  -> (4, C, HW) pre-broadcast over the lane (spatial) dim."""
    ws, bs = [], []
    for (w, b), (cin, cout, _) in zip(params, _LAYERS):
        wp = jnp.pad(w, ((0, 0), (0, 0), (0, _C - cin), (0, _C - cout)))
        w_big = jnp.transpose(wp.reshape(9, _C, _C), (2, 0, 1)).reshape(_C, 9 * _C)
        bp = jnp.pad(b, ((0, _C - cout),))
        ws.append(w_big)
        bs.append(jnp.broadcast_to(bp[:, None], (_C, HW)))
    return jnp.stack(ws), jnp.stack(bs)


def net_forward(params, x_nchw):
    """Equivalent of Net.forward.  x_nchw: (B, 1, H, W) -> (B, 3, H, W)."""
    B, cin, H, W = x_nchw.shape
    assert cin == 1
    HW = H * W

    # NCHW with C==1 -> (B, 1, H*W) is a pure reshape; zero-pad channels to C.
    x = x_nchw.reshape(B, 1, HW)
    x = jnp.pad(x, ((0, 0), (0, _C - 1), (0, 0)))
    w_stack, b_stack = _pack_params(params, HW)

    kernel = functools.partial(_fused_net_kernel, H=H, W=W,
                               roll_like_jnp=_get_roll_like_jnp())
    out = pl.pallas_call(
        kernel,
        out_shape=jax.ShapeDtypeStruct((B, _C, HW), jnp.float32),
        grid=(B,),
        in_specs=[
            pl.BlockSpec((None, _C, HW), lambda b: (b, 0, 0)),
            pl.BlockSpec((4, _C, 9 * _C), lambda b: (0, 0, 0)),
            pl.BlockSpec((4, _C, HW), lambda b: (0, 0, 0)),
        ],
        out_specs=pl.BlockSpec((None, _C, HW), lambda b: (b, 0, 0)),
        scratch_shapes=[pltpu.VMEM((9 * _C, HW), jnp.float32)],
        compiler_params=pltpu.CompilerParams(
            dimension_semantics=("parallel",)),
    )(x, w_stack, b_stack)

    # (B, C, H*W) is already flattened NCHW; drop the zero-padded out channels.
    return out.reshape(B, _C, H, W)[:, :3]


def init_params(key):
    """Deterministic init matching PyTorch Conv2d default (+/- 1/sqrt(fan_in))."""
    params = []
    for cin, cout, _ in _LAYERS:
        key, kw, kb = jax.random.split(key, 3)
        bound = 1.0 / jnp.sqrt(jnp.float32(cin * 3 * 3))
        w = jax.random.uniform(kw, (3, 3, cin, cout), jnp.float32, -bound, bound)
        b = jax.random.uniform(kb, (cout,), jnp.float32, -bound, bound)
        params.append((w, b))
    return params


def net_reference(params, x_nchw):
    """Pure-JAX reference for validation."""
    x = jnp.transpose(x_nchw, (0, 2, 3, 1))
    for (w, b), (_, _, act) in zip(params, _LAYERS):
        x = jax.lax.conv_general_dilated(
            x, w, window_strides=(1, 1), padding="SAME",
            dimension_numbers=("NHWC", "HWIO", "NHWC"),
        ) + b.reshape(1, 1, 1, -1)
        x = jnp.maximum(x, 0.0) if act == "relu" else jnp.tanh(x)
    return jnp.transpose(x, (0, 3, 1, 2))


if __name__ == "__main__":
    key = jax.random.PRNGKey(0)
    k_params, k_x = jax.random.split(key)

    params = init_params(k_params)
    x = jax.random.normal(k_x, (2, 1, 16, 16), jnp.float32)  # NCHW, 1 channel

    _get_roll_like_jnp()  # run the tiny probe eagerly before jitting

    out = jax.block_until_ready(jax.jit(net_forward)(params, x))
    assert out.shape == (2, 3, 16, 16), out.shape

    ref = jax.block_until_ready(net_reference(params, x))
    assert jnp.allclose(out, ref, rtol=1e-4, atol=1e-4), (
        float(jnp.max(jnp.abs(out - ref)))
    )

    print("KERNEL_OK")
</pallas_src>

<mosaic_0001>
module attributes {stable_mosaic.version = 11 : i64} {
  func.func @_roll_probe_kernel(%arg0: memref<8x256xf32, #tpu.memory_space<vmem>>, %arg1: memref<8x256xf32, #tpu.memory_space<vmem>>) attributes {dimension_semantics = [], scalar_prefetch = 0 : i64, scratch_operands = 0 : i64, tpu.core_type = #tpu.core_type<tc>} {
    %c0 = arith.constant 0 : index
    %c0_0 = arith.constant 0 : index
    %0 = vector.load %arg0[%c0, %c0_0] : memref<8x256xf32, #tpu.memory_space<vmem>>, vector<8x256xf32>
    %c1_i32 = arith.constant 1 : i32
    %1 = tpu.dynamic_rotate %0 by %c1_i32 dim 1 : vector<8x256xf32>, i32 -> vector<8x256xf32>
    %c0_1 = arith.constant 0 : index
    %c0_2 = arith.constant 0 : index
    %2 = vector.load %arg1[%c0_1, %c0_2] : memref<8x256xf32, #tpu.memory_space<vmem>>, vector<8x256xf32>
    tpu.vector_store %arg1[%c0_1, %c0_2], %1 {strides = array<i32>} : memref<8x256xf32, #tpu.memory_space<vmem>>, vector<8x256xf32>,
    return
  }
}

</mosaic_0001>

<llo_original>
// kernel: tpu_custom_call.1
$region0: #{tpu_custom_call.1}
  #allocation0 [shape = 'u32[]', space=smem, size = 0x4, offset = 0x4, fixed_abs, tag = 'smem constant byte address 0x4 - core index']
  #allocation1 [shape = 'u32[144,128]{1,0:T(1,128)}', space=vmem, size = 0x12000, scoped, tag = 'internal scratch']
  %s0 = inlined_call_operand.hbm [shape: f32[8,256], index: 0, kind: input, shape index: {}]
  %s1 = inlined_call_operand.hbm [shape: f32[8,256], index: 1, kind: output, shape index: {}]
  %s2 = sld [smem:[#allocation0]]
  $region18: #{tpu_custom_call.1} parent=0
    _
  %s4 = ssub.s32 1, %s2
  %s5 = scalar_select 0, %s4, %s2
  $region1: #{tpu_custom_call.1} parent=0
    #allocation2 [shape = 'u8[8192]{0}', space=vmem, size = 0x2000, scoped, tag = 'input window, operand 0, single buffered']
    #allocation3 [shape = 's32[1]{0}', space=sflag, size = 0x4, scoped, tag = 'scoped memory for tpu_custom_call.1']
    #allocation4 [shape = 's32[1]{0}', space=sflag, size = 0x4, scoped, tag = 'scoped memory for tpu_custom_call.1']
    #allocation5 [shape = 'u8[8192]{0}', space=vmem, size = 0x2000, scoped, tag = 'output window, operand 0, single buffered']
    %6 = vsyncpa [#allocation3], 0
    %7 = vsyncpa [#allocation4], 0
    // Predicated region
    $region2: #{tpu_custom_call.1} parent=1 // pred_check
      _
    $region3: #{tpu_custom_call.1} parent=1 // pred_check_branch
      %9 = sbr.rel (0) target = $region5
    $region4: #{tpu_custom_call.1} parent=1 // pred_region
      %s11 = ssub.s32 256, 256
      %12 = vsyncadd [#allocation3], %s11
      %s14 = sshll.u32 [#allocation2], 4
      %s15 = int_to_ptr.vmem [resolvable:$true] %s14
      %17 = dma.hbm_to_vmem [thread:$0]  %s0, 256, %s15, [#allocation3]
    $region5: #{tpu_custom_call.1} parent=1 // pred_fallthru
      _
    // Predicated region
    $region6: #{tpu_custom_call.1} parent=1 // pred_check
      _
    $region7: #{tpu_custom_call.1} parent=1 // pred_check_branch
      %19 = sbr.rel (0) target = $region9
    $region8: #{tpu_custom_call.1} parent=1 // pred_region
      %20 = dma.done [#allocation3], 256
    $region9: #{tpu_custom_call.1} parent=1 // pred_fallthru
      _
    %v21 = vld [vmem:[#allocation2] sm:$0xff]
    %v22 = vld [vmem:[#allocation2 + $0x8] sm:$0xff]
    %23 = vrot.lane.b32.xlu0 %v21, 1
    %v24 = vpop.permute.xlu0 %23
    %25 = vrot.lane.b32.xlu0 %v22, 1
    %v26 = vpop.permute.xlu0 %25
    %v27 = vlaneseq
    %v28 = vand.u32 %v27, 127
    %vm29 = vcmp.lt.s32.totalorder %v28, 1
    %v30 = vsel %vm29, %v24, %v26
    %v31 = vsel %vm29, %v26, %v24
    %32 = vst [vmem:[#allocation5] sm:$0xff] %v31
    %33 = vst [vmem:[#allocation5 + $0x8] sm:$0xff] %v30
    // Predicated region
    $region10: #{tpu_custom_call.1} parent=1 // pred_check
      _
    $region11: #{tpu_custom_call.1} parent=1 // pred_check_branch
      %35 = sbr.rel (0) target = $region13
    $region12: #{tpu_custom_call.1} parent=1 // pred_region
      %s37 = ssub.s32 256, 256
      %38 = vsyncadd [#allocation4], %s37
      %s40 = sshll.u32 [#allocation5], 4
      %s41 = int_to_ptr.vmem [resolvable:$true] %s40
      %43 = dma.vmem_to_hbm [thread:$0]  %s41, 256, %s1, [#allocation4]
    $region13: #{tpu_custom_call.1} parent=1 // pred_fallthru
      _
    // Predicated region
    $region14: #{tpu_custom_call.1} parent=1 // pred_check
      _
    $region15: #{tpu_custom_call.1} parent=1 // pred_check_branch
      %45 = sbr.rel (0) target = $region17
    $region16: #{tpu_custom_call.1} parent=1 // pred_region
      %46 = dma.done [#allocation4], 256
    $region17: #{tpu_custom_call.1} parent=1 // pred_fallthru
      _
    %47 = vsyncpa [#allocation3], 1
    %48 = vsyncpa [#allocation4], 1

</llo_original>
